<compile_context>
chip_gen: v6e
topology: v6e:2x2x1
jax: 0.10.0
libtpu: 0.0.40
codegen_flags: <defaults>
</compile_context>

<pallas_src>
import functools
import math

import jax
import jax.numpy as jnp
from jax.experimental import pallas as pl
from jax.experimental.pallas import tpu as pltpu


def _round_up(v, m):
    return (v + m - 1) // m * m


def _mdnn_kernel(num_classes, dom_ref, x_ref, w1_ref, b1_ref, w2_ref, b2_ref,
                 w3_ref, b3_ref, out_ref):
    # dom_ref (scalar-prefetch) is only consumed by the index_maps.
    del dom_ref

    # fc1 + ReLU  (bf16 matmul, f32 accumulate, f32 epilogue)
    h1 = jnp.dot(x_ref[...], w1_ref[...], preferred_element_type=jnp.float32)
    h1 = jnp.maximum(h1 + b1_ref[...], 0.0).astype(jnp.bfloat16)

    # fc2 + ReLU
    h2 = jnp.dot(h1, w2_ref[...], preferred_element_type=jnp.float32)
    h2 = jnp.maximum(h2 + b2_ref[...], 0.0).astype(jnp.bfloat16)

    # fc3 (logits, lane-padded to a multiple of 128)
    logits = jnp.dot(h2, w3_ref[...], preferred_element_type=jnp.float32)
    logits = logits + b3_ref[...]

    # log_softmax over the REAL classes only: mask padded lanes before the
    # max/sum reductions so lse is computed over num_classes lanes.
    lane = jax.lax.broadcasted_iota(jnp.int32, logits.shape, 1)
    masked = jnp.where(lane < num_classes, logits, jnp.float32(-1e30))
    m = jnp.max(masked, axis=1, keepdims=True)
    shifted = masked - m
    lse = jnp.log(jnp.sum(jnp.exp(shifted), axis=1, keepdims=True))
    out_ref[...] = shifted - lse  # padded lanes hold garbage; sliced off outside


@functools.partial(jax.jit, static_argnames=("num_classes", "tile_m"))
def _mdnn_forward(dom, x, w1, b1, w2, b2, w3, b3, *, num_classes, tile_m):
    padded_batch, input_size = x.shape
    hidden1 = w1.shape[-1]
    hidden2 = w2.shape[-1]
    padded_classes = w3.shape[-1]
    grid = (padded_batch // tile_m,)

    kernel = functools.partial(_mdnn_kernel, num_classes)

    # Weight/bias index_maps are constant in the batch-tile index i, so the
    # selected domain's blocks stay VMEM-resident across the whole grid.
    grid_spec = pltpu.PrefetchScalarGridSpec(
        num_scalar_prefetch=1,
        grid=grid,
        in_specs=[
            pl.BlockSpec((tile_m, input_size), lambda i, d: (i, 0)),
            pl.BlockSpec((None, input_size, hidden1), lambda i, d: (d[0], 0, 0)),
            pl.BlockSpec((None, 1, hidden1), lambda i, d: (d[0], 0, 0)),
            pl.BlockSpec((None, hidden1, hidden2), lambda i, d: (d[0], 0, 0)),
            pl.BlockSpec((None, 1, hidden2), lambda i, d: (d[0], 0, 0)),
            pl.BlockSpec((None, hidden2, padded_classes), lambda i, d: (d[0], 0, 0)),
            pl.BlockSpec((None, 1, padded_classes), lambda i, d: (d[0], 0, 0)),
        ],
        out_specs=pl.BlockSpec((tile_m, padded_classes), lambda i, d: (i, 0)),
    )

    return pl.pallas_call(
        kernel,
        out_shape=jax.ShapeDtypeStruct((padded_batch, padded_classes), jnp.float32),
        grid_spec=grid_spec,
        compiler_params=pltpu.CompilerParams(
            dimension_semantics=("parallel",)),
    )(dom, x, w1, b1, w2, b2, w3, b3)


class MDNNModelPallas:
    """JAX/Pallas port of the PyTorch MDNNModel forward pass.

    Weights are stored stacked as (num_domains + 1, in, out):
      index 0            -> shared path (domain_idx=None)
      index 1 + d        -> domain d
    Weight matrices are bf16 (f32 MXU accumulation); biases stay f32.
    """

    HIDDEN1 = 256
    HIDDEN2 = 128

    def __init__(self, input_size, num_classes, num_domains, key):
        self.input_size = input_size
        self.num_classes = num_classes
        self.num_domains = num_domains
        self.padded_classes = _round_up(max(num_classes, 128), 128)

        n_sets = num_domains + 1  # shared + per-domain
        keys = jax.random.split(key, 3 * n_sets)

        def init_linear(k, fan_in, fan_out):
            # PyTorch-style uniform init, stored as (in, out) for x @ W.
            kw, kb = jax.random.split(k)
            bound = 1.0 / math.sqrt(fan_in)
            w = jax.random.uniform(kw, (fan_in, fan_out), jnp.float32, -bound, bound)
            b = jax.random.uniform(kb, (1, fan_out), jnp.float32, -bound, bound)
            return w, b

        w1s, b1s, w2s, b2s, w3s, b3s = [], [], [], [], [], []
        for s in range(n_sets):
            w, b = init_linear(keys[3 * s + 0], input_size, self.HIDDEN1)
            w1s.append(w); b1s.append(b)
            w, b = init_linear(keys[3 * s + 1], self.HIDDEN1, self.HIDDEN2)
            w2s.append(w); b2s.append(b)
            w, b = init_linear(keys[3 * s + 2], self.HIDDEN2, num_classes)
            w3s.append(w); b3s.append(b)

        pad_c = self.padded_classes - num_classes
        self.w1_all = jnp.stack(w1s).astype(jnp.bfloat16)
        self.b1_all = jnp.stack(b1s)
        self.w2_all = jnp.stack(w2s).astype(jnp.bfloat16)
        self.b2_all = jnp.stack(b2s)
        self.w3_all = jnp.pad(jnp.stack(w3s),
                              ((0, 0), (0, 0), (0, pad_c))).astype(jnp.bfloat16)
        self.b3_all = jnp.pad(jnp.stack(b3s), ((0, 0), (0, 0), (0, pad_c)))

    def __call__(self, x, domain_idx):
        dom_sel = 0 if domain_idx is None else 1 + int(domain_idx)
        batch = x.shape[0]

        # Fill the MXU M dimension for real batches; keep tiny batches small
        # (still a multiple of 8 for the sublane constraint).
        tile_m = 256 if batch >= 256 else _round_up(batch, 8)
        padded_batch = _round_up(batch, tile_m)

        x_pad = jnp.zeros((padded_batch, self.input_size), jnp.bfloat16)
        x_pad = x_pad.at[:batch].set(x.astype(jnp.bfloat16))
        dom = jnp.array([dom_sel], jnp.int32)

        out = _mdnn_forward(
            dom, x_pad,
            self.w1_all, self.b1_all,
            self.w2_all, self.b2_all,
            self.w3_all, self.b3_all,
            num_classes=self.num_classes, tile_m=tile_m)
        return out[:batch, :self.num_classes]


def _reference_forward(x, w1, b1, w2, b2, w3, b3, num_classes):
    # Pure-JAX reference that mirrors the kernel's bf16 storage / f32 accumulate.
    hp = jax.lax.Precision.HIGHEST
    xb = x.astype(jnp.bfloat16).astype(jnp.float32)
    h1 = jnp.maximum(jnp.dot(xb, w1.astype(jnp.float32), precision=hp) + b1, 0.0)
    h1 = h1.astype(jnp.bfloat16).astype(jnp.float32)
    h2 = jnp.maximum(jnp.dot(h1, w2.astype(jnp.float32), precision=hp) + b2, 0.0)
    h2 = h2.astype(jnp.bfloat16).astype(jnp.float32)
    logits = jnp.dot(h2, w3.astype(jnp.float32), precision=hp) + b3
    logits = logits[:, :num_classes]
    return jax.nn.log_softmax(logits, axis=1)


if __name__ == "__main__":
    key = jax.random.PRNGKey(0)
    k_param, k_x1, k_x2 = jax.random.split(key, 3)

    batch = 8
    input_size = 32
    num_classes = 10
    num_domains = 3

    model = MDNNModelPallas(input_size, num_classes, num_domains, k_param)
    x = jax.random.normal(k_x1, (batch, input_size), jnp.float32)

    # Shared path (domain_idx=None) and a domain-specific path.
    out_shared = model(x, None)
    jax.block_until_ready(out_shared)
    out_dom = model(x, 1)
    jax.block_until_ready(out_dom)

    ref_shared = _reference_forward(
        x, model.w1_all[0], model.b1_all[0], model.w2_all[0], model.b2_all[0],
        model.w3_all[0], model.b3_all[0], num_classes)
    ref_dom = _reference_forward(
        x, model.w1_all[2], model.b1_all[2], model.w2_all[2], model.b2_all[2],
        model.w3_all[2], model.b3_all[2], num_classes)

    assert out_shared.shape == (batch, num_classes)
    assert out_dom.shape == (batch, num_classes)
    assert jnp.allclose(out_shared, ref_shared, atol=1e-3, rtol=1e-3)
    assert jnp.allclose(out_dom, ref_dom, atol=1e-3, rtol=1e-3)
    # log_softmax sanity: rows exponentiate-and-sum to 1.
    assert jnp.allclose(jnp.exp(out_shared).sum(axis=1), 1.0, atol=1e-3)

    # Larger batch exercising the multi-tile (pipelined, parallel) grid path.
    big_batch = 512
    xb = jax.random.normal(k_x2, (big_batch, input_size), jnp.float32)
    out_big = model(xb, 2)
    jax.block_until_ready(out_big)
    ref_big = _reference_forward(
        xb, model.w1_all[3], model.b1_all[3], model.w2_all[3], model.b2_all[3],
        model.w3_all[3], model.b3_all[3], num_classes)
    assert out_big.shape == (big_batch, num_classes)
    assert jnp.allclose(out_big, ref_big, atol=1e-3, rtol=1e-3)

    print("KERNEL_OK")
</pallas_src>

<mosaic_0001>
module attributes {stable_mosaic.version = 11 : i64} {
  func.func @_mdnn_kernel(%arg0: i32, %arg1: memref<1xi32, #tpu.memory_space<smem>>, %arg2: memref<8x32xbf16, #tpu.memory_space<vmem>>, %arg3: memref<1x32x256xbf16, #tpu.memory_space<vmem>>, %arg4: memref<1x1x256xf32, #tpu.memory_space<vmem>>, %arg5: memref<1x256x128xbf16, #tpu.memory_space<vmem>>, %arg6: memref<1x1x128xf32, #tpu.memory_space<vmem>>, %arg7: memref<1x128x128xbf16, #tpu.memory_space<vmem>>, %arg8: memref<1x1x128xf32, #tpu.memory_space<vmem>>, %arg9: memref<8x128xf32, #tpu.memory_space<vmem>>) attributes {dimension_semantics = [#tpu.dimension_semantics<parallel>], iteration_bounds = array<i64: 1>, scalar_prefetch = 1 : i64, scratch_operands = 0 : i64, tpu.core_type = #tpu.core_type<tc>, window_params = [{transform_indices = @transform_0, window_bounds = array<i64: 8, 32>}, {transform_indices = @transform_1, window_bounds = array<i64: 1, 32, 256>}, {transform_indices = @transform_2, window_bounds = array<i64: 1, 1, 256>}, {transform_indices = @transform_3, window_bounds = array<i64: 1, 256, 128>}, {transform_indices = @transform_4, window_bounds = array<i64: 1, 1, 128>}, {transform_indices = @transform_5, window_bounds = array<i64: 1, 128, 128>}, {transform_indices = @transform_6, window_bounds = array<i64: 1, 1, 128>}, {transform_indices = @transform_7, window_bounds = array<i64: 8, 128>}]} {
    %c0 = arith.constant 0 : index
    %c0_0 = arith.constant 0 : index
    %0 = vector.load %arg2[%c0, %c0_0] : memref<8x32xbf16, #tpu.memory_space<vmem>>, vector<8x32xbf16>
    %c0_1 = arith.constant 0 : index
    %c0_2 = arith.constant 0 : index
    %c0_3 = arith.constant 0 : index
    %1 = vector.load %arg3[%c0_1, %c0_2, %c0_3] : memref<1x32x256xbf16, #tpu.memory_space<vmem>>, vector<1x32x256xbf16>
    %2 = vector.shape_cast %1 : vector<1x32x256xbf16> to vector<32x256xbf16>
    %cst = arith.constant dense<0.000000e+00> : vector<8x256xf32>
    %3 = tpu.matmul %0, %2, %cst {dimension_numbers = #tpu.dot_dimension_numbers<[1], [0], [0], [1], [0, 0, 1, 1], [], []>} : vector<8x32xbf16>, vector<32x256xbf16>, vector<8x256xf32> -> vector<8x256xf32>
    %c0_4 = arith.constant 0 : index
    %c0_5 = arith.constant 0 : index
    %c0_6 = arith.constant 0 : index
    %4 = vector.load %arg4[%c0_4, %c0_5, %c0_6] : memref<1x1x256xf32, #tpu.memory_space<vmem>>, vector<1x1x256xf32>
    %5 = vector.shape_cast %4 : vector<1x1x256xf32> to vector<1x256xf32>
    %6 = vector.broadcast %5 : vector<1x256xf32> to vector<8x256xf32>
    %7 = arith.addf %3, %6 : vector<8x256xf32>
    %cst_7 = arith.constant 0.000000e+00 : f32
    %8 = vector.broadcast %cst_7 : f32 to vector<8x256xf32>
    %9 = arith.maximumf %7, %8 : vector<8x256xf32>
    %10 = arith.truncf %9 : vector<8x256xf32> to vector<8x256xbf16>
    %c0_8 = arith.constant 0 : index
    %c0_9 = arith.constant 0 : index
    %c0_10 = arith.constant 0 : index
    %11 = vector.load %arg5[%c0_8, %c0_9, %c0_10] : memref<1x256x128xbf16, #tpu.memory_space<vmem>>, vector<1x256x128xbf16>
    %12 = vector.shape_cast %11 : vector<1x256x128xbf16> to vector<256x128xbf16>
    %cst_11 = arith.constant dense<0.000000e+00> : vector<8x128xf32>
    %13 = tpu.matmul %10, %12, %cst_11 {dimension_numbers = #tpu.dot_dimension_numbers<[1], [0], [0], [1], [0, 0, 1, 1], [], []>} : vector<8x256xbf16>, vector<256x128xbf16>, vector<8x128xf32> -> vector<8x128xf32>
    %c0_12 = arith.constant 0 : index
    %c0_13 = arith.constant 0 : index
    %c0_14 = arith.constant 0 : index
    %14 = vector.load %arg6[%c0_12, %c0_13, %c0_14] : memref<1x1x128xf32, #tpu.memory_space<vmem>>, vector<1x1x128xf32>
    %15 = vector.shape_cast %14 : vector<1x1x128xf32> to vector<1x128xf32>
    %16 = vector.broadcast %15 : vector<1x128xf32> to vector<8x128xf32>
    %17 = arith.addf %13, %16 : vector<8x128xf32>
    %cst_15 = arith.constant 0.000000e+00 : f32
    %18 = vector.broadcast %cst_15 : f32 to vector<8x128xf32>
    %19 = arith.maximumf %17, %18 : vector<8x128xf32>
    %20 = arith.truncf %19 : vector<8x128xf32> to vector<8x128xbf16>
    %c0_16 = arith.constant 0 : index
    %c0_17 = arith.constant 0 : index
    %c0_18 = arith.constant 0 : index
    %21 = vector.load %arg7[%c0_16, %c0_17, %c0_18] : memref<1x128x128xbf16, #tpu.memory_space<vmem>>, vector<1x128x128xbf16>
    %22 = vector.shape_cast %21 : vector<1x128x128xbf16> to vector<128x128xbf16>
    %cst_19 = arith.constant dense<0.000000e+00> : vector<8x128xf32>
    %23 = tpu.matmul %20, %22, %cst_19 {dimension_numbers = #tpu.dot_dimension_numbers<[1], [0], [0], [1], [0, 0, 1, 1], [], []>} : vector<8x128xbf16>, vector<128x128xbf16>, vector<8x128xf32> -> vector<8x128xf32>
    %c0_20 = arith.constant 0 : index
    %c0_21 = arith.constant 0 : index
    %c0_22 = arith.constant 0 : index
    %24 = vector.load %arg8[%c0_20, %c0_21, %c0_22] : memref<1x1x128xf32, #tpu.memory_space<vmem>>, vector<1x1x128xf32>
    %25 = vector.shape_cast %24 : vector<1x1x128xf32> to vector<1x128xf32>
    %26 = vector.broadcast %25 : vector<1x128xf32> to vector<8x128xf32>
    %27 = arith.addf %23, %26 : vector<8x128xf32>
    %28 = tpu.iota {dimensions = array<i32: 1>} : vector<8x128xi32>
    %c10_i32 = arith.constant 10 : i32
    %29 = vector.broadcast %c10_i32 : i32 to vector<8x128xi32>
    %30 = arith.cmpi slt, %28, %29 : vector<8x128xi32>
    %cst_23 = arith.constant -1.000000e+30 : f32
    %31 = vector.broadcast %cst_23 : f32 to vector<8x128xf32>
    %32 = arith.select %30, %27, %31 : vector<8x128xi1>, vector<8x128xf32>
    %cst_24 = arith.constant dense<0xFF800000> : vector<8xf32>
    %33 = vector.multi_reduction <maximumf>, %32, %cst_24 [1] : vector<8x128xf32> to vector<8xf32>
    %34 = vector.shape_cast %33 : vector<8xf32> to vector<8x1xf32>
    %35 = vector.broadcast %34 : vector<8x1xf32> to vector<8x128xf32>
    %36 = arith.subf %32, %35 : vector<8x128xf32>
    %37 = math.exp %36 : vector<8x128xf32>
    %cst_25 = arith.constant dense<0.000000e+00> : vector<8xf32>
    %38 = vector.multi_reduction <add>, %37, %cst_25 [1] : vector<8x128xf32> to vector<8xf32>
    %39 = vector.shape_cast %38 : vector<8xf32> to vector<8x1xf32>
    %40 = math.log %39 : vector<8x1xf32>
    %41 = vector.broadcast %40 : vector<8x1xf32> to vector<8x128xf32>
    %42 = arith.subf %36, %41 : vector<8x128xf32>
    %c0_26 = arith.constant 0 : index
    %c0_27 = arith.constant 0 : index
    %43 = vector.load %arg9[%c0_26, %c0_27] : memref<8x128xf32, #tpu.memory_space<vmem>>, vector<8x128xf32>
    tpu.vector_store %arg9[%c0_26, %c0_27], %42 {strides = array<i32>} : memref<8x128xf32, #tpu.memory_space<vmem>>, vector<8x128xf32>,
    return
  }
  func.func @transform_0(%arg0: i32, %arg1: memref<1xi32, #tpu.memory_space<smem>>) -> (i32, i32) {
    %c0_i32 = arith.constant 0 : i32
    %c0_i32_0 = arith.constant 0 : i32
    return %arg0, %c0_i32 : i32, i32
  }
  func.func @transform_1(%arg0: i32, %arg1: memref<1xi32, #tpu.memory_space<smem>>) -> (i32, i32, i32) {
    %c0 = arith.constant 0 : index
    %0 = memref.load %arg1[%c0] : memref<1xi32, #tpu.memory_space<smem>>
    %c0_i32 = arith.constant 0 : i32
    %c0_i32_0 = arith.constant 0 : i32
    %c0_i32_1 = arith.constant 0 : i32
    return %0, %c0_i32, %c0_i32_0 : i32, i32, i32
  }
  func.func @transform_2(%arg0: i32, %arg1: memref<1xi32, #tpu.memory_space<smem>>) -> (i32, i32, i32) {
    %c0 = arith.constant 0 : index
    %0 = memref.load %arg1[%c0] : memref<1xi32, #tpu.memory_space<smem>>
    %c0_i32 = arith.constant 0 : i32
    %c0_i32_0 = arith.constant 0 : i32
    %c0_i32_1 = arith.constant 0 : i32
    return %0, %c0_i32, %c0_i32_0 : i32, i32, i32
  }
  func.func @transform_3(%arg0: i32, %arg1: memref<1xi32, #tpu.memory_space<smem>>) -> (i32, i32, i32) {
    %c0 = arith.constant 0 : index
    %0 = memref.load %arg1[%c0] : memref<1xi32, #tpu.memory_space<smem>>
    %c0_i32 = arith.constant 0 : i32
    %c0_i32_0 = arith.constant 0 : i32
    %c0_i32_1 = arith.constant 0 : i32
    return %0, %c0_i32, %c0_i32_0 : i32, i32, i32
  }
  func.func @transform_4(%arg0: i32, %arg1: memref<1xi32, #tpu.memory_space<smem>>) -> (i32, i32, i32) {
    %c0 = arith.constant 0 : index
    %0 = memref.load %arg1[%c0] : memref<1xi32, #tpu.memory_space<smem>>
    %c0_i32 = arith.constant 0 : i32
    %c0_i32_0 = arith.constant 0 : i32
    %c0_i32_1 = arith.constant 0 : i32
    return %0, %c0_i32, %c0_i32_0 : i32, i32, i32
  }
  func.func @transform_5(%arg0: i32, %arg1: memref<1xi32, #tpu.memory_space<smem>>) -> (i32, i32, i32) {
    %c0 = arith.constant 0 : index
    %0 = memref.load %arg1[%c0] : memref<1xi32, #tpu.memory_space<smem>>
    %c0_i32 = arith.constant 0 : i32
    %c0_i32_0 = arith.constant 0 : i32
    %c0_i32_1 = arith.constant 0 : i32
    return %0, %c0_i32, %c0_i32_0 : i32, i32, i32
  }
  func.func @transform_6(%arg0: i32, %arg1: memref<1xi32, #tpu.memory_space<smem>>) -> (i32, i32, i32) {
    %c0 = arith.constant 0 : index
    %0 = memref.load %arg1[%c0] : memref<1xi32, #tpu.memory_space<smem>>
    %c0_i32 = arith.constant 0 : i32
    %c0_i32_0 = arith.constant 0 : i32
    %c0_i32_1 = arith.constant 0 : i32
    return %0, %c0_i32, %c0_i32_0 : i32, i32, i32
  }
  func.func @transform_7(%arg0: i32, %arg1: memref<1xi32, #tpu.memory_space<smem>>) -> (i32, i32) {
    %c0_i32 = arith.constant 0 : i32
    %c0_i32_0 = arith.constant 0 : i32
    return %arg0, %c0_i32 : i32, i32
  }
}

</mosaic_0001>

<llo_original>
// kernel: _mdnn_forward.1
$region0: #{_mdnn_forward.1}
  #allocation0 [shape = 'u32[]', space=smem, size = 0x4, offset = 0x4, fixed_abs, tag = 'smem constant byte address 0x4 - core index']
  #allocation1 [shape = 'u32[144,128]{1,0:T(1,128)}', space=vmem, size = 0x12000, scoped, tag = 'internal scratch']
  #allocation2 [shape = 's32[1]{0}', space=sflag, size = 0x4, scoped, tag = 'scoped memory for _mdnn_forward.1']
  #allocation3 [shape = 's32[1]{0:T(128)S(6)}', space=smem, size = 0x200, scoped, tag = 'prefetched SMEM operand 0']
  %s0 = inlined_call_operand.<no memory space> [shape: s32[1], index: 0, kind: input, shape index: {}]
  %s1 = inlined_call_operand.hbm [shape: bf16[8,32], index: 1, kind: input, shape index: {}]
  %s2 = inlined_call_operand.hbm [shape: bf16[4,32,256], index: 2, kind: input, shape index: {}]
  %s3 = inlined_call_operand.hbm [shape: f32[4,1,256], index: 3, kind: input, shape index: {}]
  %s4 = inlined_call_operand.hbm [shape: bf16[4,256,128], index: 4, kind: input, shape index: {}]
  %s5 = inlined_call_operand.vmem [shape: f32[4,1,128], index: 5, kind: input, shape index: {}]
  %s6 = inlined_call_operand.hbm [shape: bf16[4,128,128], index: 6, kind: input, shape index: {}]
  %s7 = inlined_call_operand.vmem [shape: f32[4,1,128], index: 7, kind: input, shape index: {}]
  %s8 = inlined_call_operand.hbm [shape: f32[8,128], index: 8, kind: output, shape index: {}]
  %s9 = sld [smem:[#allocation0]]
  $region58: #{_mdnn_forward.1} parent=0
    _
  %s11 = ssub.s32 1, %s9
  %s12 = scalar_select 0, %s11, %s9
  %13 = sst [smem:[#allocation3]] %s0
  $region1: #{_mdnn_forward.1} parent=0
    #allocation4 [shape = 'u8[2048]{0}', space=vmem, size = 0x800, scoped, tag = 'input window, operand 1, single buffered']
    #allocation5 [shape = 's32[1]{0}', space=sflag, size = 0x4, scoped, tag = 'scoped memory for _mdnn_forward.1']
    #allocation6 [shape = 's32[1]{0}', space=sflag, size = 0x4, scoped, tag = 'scoped memory for _mdnn_forward.1']
    #allocation7 [shape = 'u8[16384]{0}', space=vmem, size = 0x4000, scoped, tag = 'input window, operand 2, single buffered']
    #allocation8 [shape = 's32[1]{0}', space=sflag, size = 0x4, scoped, tag = 'scoped memory for _mdnn_forward.1']
    #allocation9 [shape = 'u8[1024]{0}', space=vmem, size = 0x400, scoped, tag = 'input window, operand 3, single buffered']
    #allocation10 [shape = 'u8[65536]{0}', space=vmem, size = 0x10000, scoped, tag = 'input window, operand 4, single buffered']
    #allocation11 [shape = 's32[1]{0}', space=sflag, size = 0x4, scoped, tag = 'scoped memory for _mdnn_forward.1']
    #allocation12 [shape = 'u8[32768]{0}', space=vmem, size = 0x8000, scoped, tag = 'input window, operand 6, single buffered']
    #allocation13 [shape = 'u8[4096]{0}', space=vmem, size = 0x1000, scoped, tag = 'output window, operand 0, single buffered']
    %14 = vsyncpa [#allocation5], 0
    %15 = vsyncpa [#allocation8], 0
    %16 = vsyncpa [#allocation11], 0
    %17 = vsyncpa [#allocation6], 0
    // Predicated region
    $region2: #{_mdnn_forward.1} parent=1 // pred_check
      _
    $region3: #{_mdnn_forward.1} parent=1 // pred_check_branch
      %19 = sbr.rel (0) target = $region5
    $region4: #{_mdnn_forward.1} parent=1 // pred_region
      %s21 = ssub.s32 64, 64
      %22 = vsyncadd [#allocation5], %s21
      %s24 = sshll.u32 [#allocation4], 4
      %s25 = int_to_ptr.vmem [resolvable:$true] %s24
      %27 = dma.hbm_to_vmem [thread:$0]  %s1, 64, %s25, [#allocation5]
    $region5: #{_mdnn_forward.1} parent=1 // pred_fallthru
      _
    // Predicated region
    $region6: #{_mdnn_forward.1} parent=1 // pred_check
      _
    $region7: #{_mdnn_forward.1} parent=1 // pred_check_branch
      %29 = sbr.rel (0) target = $region9
    $region8: #{_mdnn_forward.1} parent=1 // pred_region
      %s30 = sld [smem:[#allocation3]]
      %s32 = ssub.s32 512, 512
      %33 = vsyncadd [#allocation8], %s32
      %s34 = smul.addr %s30, 8
      %s35 = smul.addr %s34, 64
      %s36 = scalar_lea.hbm %s2, %s35
      %s37 = sshll.u32 [#allocation7], 4
      %s38 = int_to_ptr.vmem [resolvable:$true] %s37
      %43 = dma.hbm_to_vmem [thread:$0]  %s36, 512, %s38, [#allocation8], 128, 128, 8
    $region9: #{_mdnn_forward.1} parent=1 // pred_fallthru
      _
    // Predicated region
    $region10: #{_mdnn_forward.1} parent=1 // pred_check
      _
    $region11: #{_mdnn_forward.1} parent=1 // pred_check_branch
      %45 = sbr.rel (0) target = $region13
    $region12: #{_mdnn_forward.1} parent=1 // pred_region
      %s46 = sld [smem:[#allocation3]]
      %s48 = ssub.s32 32, 32
      %49 = vsyncadd [#allocation8], %s48
      %s50 = smul.addr %s46, 2
      %s51 = smul.addr %s50, 16
      %s52 = scalar_lea.hbm %s3, %s51
      %s54 = sshll.u32 [#allocation9], 4
      %s55 = int_to_ptr.vmem [resolvable:$true] %s54
      %57 = dma.hbm_to_vmem [thread:$0]  %s52, 32, %s55, [#allocation8]
    $region13: #{_mdnn_forward.1} parent=1 // pred_fallthru
      _
    // Predicated region
    $region14: #{_mdnn_forward.1} parent=1 // pred_check
      _
    $region15: #{_mdnn_forward.1} parent=1 // pred_check_branch
      %59 = sbr.rel (0) target = $region17
    $region16: #{_mdnn_forward.1} parent=1 // pred_region
      %s60 = sld [smem:[#allocation3]]
      %s62 = ssub.s32 2048, 2048
      %63 = vsyncadd [#allocation11], %s62
      %s64 = smul.addr %s60, 32
      %s65 = smul.addr %s64, 64
      %s66 = scalar_lea.hbm %s4, %s65
      %s67 = sshll.u32 [#allocation10], 4
      %s68 = int_to_ptr.vmem [resolvable:$true] %s67
      %73 = dma.hbm_to_vmem [thread:$0]  %s66, 2048, %s68, [#allocation11], 64, 64, 4
    $region17: #{_mdnn_forward.1} parent=1 // pred_fallthru
      _
    // Predicated region
    $region18: #{_mdnn_forward.1} parent=1 // pred_check
      _
    $region19: #{_mdnn_forward.1} parent=1 // pred_check_branch
      %75 = sbr.rel (0) target = $region21
    $region20: #{_mdnn_forward.1} parent=1 // pred_region
      %s76 = sld [smem:[#allocation3]]
      %p77 = scmp.lt.s32.totalorder %s76, 3
      %s78 = scalar_select %p77, %s76, 3
      %s79 = scalar_lea.vmem %s5, %s78
      %s80 = sld [smem:[#allocation3]]
    $region21: #{_mdnn_forward.1} parent=1 // pred_fallthru
      _
    // Predicated region
    $region22: #{_mdnn_forward.1} parent=1 // pred_check
      _
    $region23: #{_mdnn_forward.1} parent=1 // pred_check_branch
      %82 = sbr.rel (0) target = $region25
    $region24: #{_mdnn_forward.1} parent=1 // pred_region
      %s83 = sld [smem:[#allocation3]]
      %s85 = ssub.s32 1024, 1024
      %86 = vsyncadd [#allocation11], %s85
      %s87 = smul.addr %s83, 16
      %s88 = smul.addr %s87, 64
      %s89 = scalar_lea.hbm %s6, %s88
      %s90 = sshll.u32 [#allocation12], 4
      %s91 = int_to_ptr.vmem [resolvable:$true] %s90
      %96 = dma.hbm_to_vmem [thread:$0]  %s89, 1024, %s91, [#allocation11], 64, 64, 4
    $region25: #{_mdnn_forward.1} parent=1 // pred_fallthru
      _
    // Predicated region
    $region26: #{_mdnn_forward.1} parent=1 // pred_check
      _
    $region27: #{_mdnn_forward.1} parent=1 // pred_check_branch
      %98 = sbr.rel (0) target = $region29
    $region28: #{_mdnn_forward.1} parent=1 // pred_region
      %s99 = sld [smem:[#allocation3]]
      %p100 = scmp.lt.s32.totalorder %s99, 3
      %s101 = scalar_select %p100, %s99, 3
      %s102 = scalar_lea.vmem %s7, %s101
      %s103 = sld [smem:[#allocation3]]
    $region29: #{_mdnn_forward.1} parent=1 // pred_fallthru
      _
    // Predicated region
    $region30: #{_mdnn_forward.1} parent=1 // pred_check
      _
    $region31: #{_mdnn_forward.1} parent=1 // pred_check_branch
      %105 = sbr.rel (0) target = $region33
    $region32: #{_mdnn_forward.1} parent=1 // pred_region
      %106 = dma.done [#allocation5], 64
    $region33: #{_mdnn_forward.1} parent=1 // pred_fallthru
      _
    // Predicated region
    $region34: #{_mdnn_forward.1} parent=1 // pred_check
      _
    $region35: #{_mdnn_forward.1} parent=1 // pred_check_branch
      %108 = sbr.rel (0) target = $region37
    $region36: #{_mdnn_forward.1} parent=1 // pred_region
      %109 = dma.done [#allocation8], 512
    $region37: #{_mdnn_forward.1} parent=1 // pred_fallthru
      _
    // Predicated region
    $region38: #{_mdnn_forward.1} parent=1 // pred_check
      _
    $region39: #{_mdnn_forward.1} parent=1 // pred_check_branch
      %111 = sbr.rel (0) target = $region41
    $region40: #{_mdnn_forward.1} parent=1 // pred_region
      %112 = dma.done [#allocation8], 32
    $region41: #{_mdnn_forward.1} parent=1 // pred_fallthru
      _
    // Predicated region
    $region42: #{_mdnn_forward.1} parent=1 // pred_check
      _
    $region43: #{_mdnn_forward.1} parent=1 // pred_check_branch
      %114 = sbr.rel (0) target = $region45
    $region44: #{_mdnn_forward.1} parent=1 // pred_region
      %115 = dma.done [#allocation11], 2048
    $region45: #{_mdnn_forward.1} parent=1 // pred_fallthru
      _
    // Predicated region
    $region46: #{_mdnn_forward.1} parent=1 // pred_check
      _
    $region47: #{_mdnn_forward.1} parent=1 // pred_check_branch
      %117 = sbr.rel (0) target = $region49
    $region48: #{_mdnn_forward.1} parent=1 // pred_region
      %118 = dma.done [#allocation11], 1024
    $region49: #{_mdnn_forward.1} parent=1 // pred_fallthru
      _
    %s119 = sld [smem:[#allocation3]]
    %p120 = scmp.lt.s32.totalorder %s119, 3
    %s121 = scalar_select %p120, %s119, 3
    %s122 = scalar_lea.vmem %s5, %s121
    %s123 = sld [smem:[#allocation3]]
    %p124 = scmp.lt.s32.totalorder %s123, 3
    %s125 = scalar_select %p124, %s123, 3
    %s126 = scalar_lea.vmem %s7, %s125
    %s127 = sld [smem:[#allocation3]]
    %s128 = sld [smem:[#allocation3]]
    %s129 = sld [smem:[#allocation3]]
    %s130 = sld [smem:[#allocation3]]
    %p131 = scmp.lt.s32.totalorder %s130, 3
    %s132 = scalar_select %p131, %s130, 3
    %s133 = scalar_lea.vmem %s5, %s132
    %s134 = sld [smem:[#allocation3]]
    %s135 = sld [smem:[#allocation3]]
    %s136 = sld [smem:[#allocation3]]
    %p137 = scmp.lt.s32.totalorder %s136, 3
    %s138 = scalar_select %p137, %s136, 3
    %s139 = scalar_lea.vmem %s7, %s138
    %s140 = sld [smem:[#allocation3]]
    %v142 = vld [vmem:[#allocation4] sm:$0xf]
    %v143 = vld [vmem:[#allocation7] sm:$0xff]
    %v144 = vld [vmem:[#allocation7 + $0x8] sm:$0xff]
    %v145 = vld [vmem:[#allocation7 + $0x10] sm:$0xff]
    %v146 = vld [vmem:[#allocation7 + $0x18] sm:$0xff]
    %v147 = vld [vmem:[#allocation9] sm:$0x3]
    %v149 = vlaneseq
    %v150 = vshrl.u32 %v149, 7
    %v151 = vsub.s32 0, %v150
    %v152 = vrot.slane %v147, %v151
    %v153 = vlaneseq
    %v154 = vshrl.u32 %v153, 7
    %v155 = vsub.s32 1, %v154
    %v156 = vrot.slane %v147, %v155
    %v163 = vunpack.c.l.b16 %v143
    %v164 = vunpack.c.h.b16 %v143
    %v165 = vunpack.c.l.b16 %v144
    %v166 = vunpack.c.h.b16 %v144
    %v167 = vunpack.c.l.b16 %v145
    %v168 = vunpack.c.h.b16 %v145
    %v169 = vunpack.c.l.b16 %v146
    %v170 = vunpack.c.h.b16 %v146
    %v171 = vpack.c.b16 %v165, %v163
    %v172 = vpack.c.b16 %v166, %v164
    %v173 = vpack.c.b16 %v169, %v167
    %v174 = vpack.c.b16 %v170, %v168
    %vm179 = vcmask 261120
    %v181 = vsel %vm179, %v142, 0
    %183 = vmatprep.subr.bf16.mxu0 0
    %184 = vmatpush1.bf16.msra.mxu0 0
    %185 = vmatprep.subr.bf16.mxu0 0
    %186 = vmatpush1.bf16.msra.mxu0 0
    %187 = vmatprep.subr.bf16.mxu0 0
    %188 = vmatpush1.bf16.msra.mxu0 0
    %189 = vmatprep.subr.bf16.mxu0 0
    %190 = vmatpush1.bf16.msra.mxu0 0
    %191 = vmatprep.subr.bf16.mxu0 0
    %192 = vmatpush1.bf16.msra.mxu0 0
    %193 = vmatprep.subr.bf16.mxu0 0
    %194 = vmatpush1.bf16.msra.mxu0 0
    %195 = vmatprep.subr.bf16.mxu0 %v174
    %196 = vmatpush1.bf16.msra.mxu0 %v173
    %197 = vmatprep.subr.bf16.mxu0 %v172
    %198 = vmatpush1.bf16.msra.mxu0 %v171
    %199 = vmatprep.subr.bf16.mxu0 0
    %200 = vmatpush2.bf16.msra.mxu0 0
    %201 = vmatprep.subr.bf16.mxu0 0
    %202 = vmatpush2.bf16.msra.mxu0 0
    %203 = vmatprep.subr.bf16.mxu0 0
    %204 = vmatpush2.bf16.msra.mxu0 0
    %205 = vmatprep.subr.bf16.mxu0 0
    %206 = vmatpush2.bf16.msra.mxu0 0
    %207 = vmatprep.subr.bf16.mxu0 0
    %208 = vmatpush2.bf16.msra.mxu0 0
    %209 = vmatprep.subr.bf16.mxu0 0
    %210 = vmatpush2.bf16.msra.mxu0 0
    %211 = vmatprep.subr.bf16.mxu0 0
    %212 = vmatpush2.bf16.msra.mxu0 0
    %213 = vmatprep.subr.bf16.mxu0 0
    %214 = vmatpush2.bf16.msra.mxu0 0
    %215 = vmatprep.mubr.bf16.mxu0 0
    %216 = vmatmul.mubr.bf16.gmra.mxu0 %v181
    %v217 = vpop.f32.mrf.mxu0
    %v218 = vadd.f32 %v152, %v217
    %v219 = vpop.f32.mrf.mxu0
    %v220 = vadd.f32 %v156, %v219
    %v221 = vpop.f32.mrf.mxu0
    %v222 = vpop.f32.mrf.mxu0
    %223 = vdwg.mxu0
    %v224 = vmax.f32 %v218, 0.0
    %v225 = vmax.f32 %v220, 0.0
    %v226 = vpack.c.bf16 %v224, %v224
    %v227 = vpack.c.bf16 %v225, %v225
    %v228 = vld [vmem:[#allocation10] sm:$0xf]
    %v229 = vld [vmem:[#allocation10 + $0x4] sm:$0xf]
    %v230 = vld [vmem:[#allocation10 + $0x8] sm:$0xf]
    %v231 = vld [vmem:[#allocation10 + $0xc] sm:$0xf]
    %v232 = vld [vmem:[#allocation10 + $0x10] sm:$0xf]
    %v233 = vld [vmem:[#allocation10 + $0x14] sm:$0xf]
    %v234 = vld [vmem:[#allocation10 + $0x18] sm:$0xf]
    %v235 = vld [vmem:[#allocation10 + $0x1c] sm:$0xf]
    %v236 = vld [vmem:[#allocation10 + $0x20] sm:$0xf]
    %v237 = vld [vmem:[#allocation10 + $0x24] sm:$0xf]
    %v238 = vld [vmem:[#allocation10 + $0x28] sm:$0xf]
    %v239 = vld [vmem:[#allocation10 + $0x2c] sm:$0xf]
    %v240 = vld [vmem:[#allocation10 + $0x30] sm:$0xf]
    %v241 = vld [vmem:[#allocation10 + $0x34] sm:$0xf]
    %v242 = vld [vmem:[#allocation10 + $0x38] sm:$0xf]
    %v243 = vld [vmem:[#allocation10 + $0x3c] sm:$0xf]
    %v244 = vld [vmem:[#allocation10 + $0x40] sm:$0xf]
    %v245 = vld [vmem:[#allocation10 + $0x44] sm:$0xf]
    %v246 = vld [vmem:[#allocation10 + $0x48] sm:$0xf]
    %v247 = vld [vmem:[#allocation10 + $0x4c] sm:$0xf]
    %v248 = vld [vmem:[#allocation10 + $0x50] sm:$0xf]
    %v249 = vld [vmem:[#allocation10 + $0x54] sm:$0xf]
    %v250 = vld [vmem:[#allocation10 + $0x58] sm:$0xf]
    %v251 = vld [vmem:[#allocation10 + $0x5c] sm:$0xf]
    %v252 = vld [vmem:[#allocation10 + $0x60] sm:$0xf]
    %v253 = vld [vmem:[#allocation10 + $0x64] sm:$0xf]
    %v254 = vld [vmem:[#allocation10 + $0x68] sm:$0xf]
    %v255 = vld [vmem:[#allocation10 + $0x6c] sm:$0xf]
    %v256 = vld [vmem:[#allocation10 + $0x70] sm:$0xf]
    %v257 = vld [vmem:[#allocation10 + $0x74] sm:$0xf]
    %v258 = vld [vmem:[#allocation10 + $0x78] sm:$0xf]
    %v259 = vld [vmem:[#allocation10 + $0x7c] sm:$0xf]
    %v260 = vld [vmem:[%s133] sm:$0x1]
    %v262 = vlaneseq
    %v263 = vshrl.u32 %v262, 7
    %v264 = vsub.s32 0, %v263
    %v265 = vrot.slane %v260, %v264
    %v299 = vunpack.c.l.b16 %v228
    %v300 = vunpack.c.l.b16 %v229
    %v301 = vunpack.c.l.b16 %v230
    %v302 = vunpack.c.l.b16 %v231
    %v303 = vunpack.c.l.b16 %v232
    %v304 = vunpack.c.l.b16 %v233
    %v305 = vunpack.c.l.b16 %v234
    %v306 = vunpack.c.l.b16 %v235
    %v307 = vunpack.c.l.b16 %v236
    %v308 = vunpack.c.l.b16 %v237
    %v309 = vunpack.c.l.b16 %v238
    %v310 = vunpack.c.l.b16 %v239
    %v311 = vunpack.c.l.b16 %v240
    %v312 = vunpack.c.l.b16 %v241
    %v313 = vunpack.c.l.b16 %v242
    %v314 = vunpack.c.l.b16 %v243
    %v315 = vunpack.c.l.b16 %v244
    %v316 = vunpack.c.l.b16 %v245
    %v317 = vunpack.c.l.b16 %v246
    %v318 = vunpack.c.l.b16 %v247
    %v319 = vunpack.c.l.b16 %v248
    %v320 = vunpack.c.l.b16 %v249
    %v321 = vunpack.c.l.b16 %v250
    %v322 = vunpack.c.l.b16 %v251
    %v323 = vunpack.c.l.b16 %v252
    %v324 = vunpack.c.l.b16 %v253
    %v325 = vunpack.c.l.b16 %v254
    %v326 = vunpack.c.l.b16 %v255
    %v327 = vunpack.c.l.b16 %v256
    %v328 = vunpack.c.l.b16 %v257
    %v329 = vunpack.c.l.b16 %v258
    %v330 = vunpack.c.l.b16 %v259
    %v331 = vpack.c.b16 %v300, %v299
    %v332 = vpack.c.b16 %v302, %v301
    %v333 = vpack.c.b16 %v304, %v303
    %v334 = vpack.c.b16 %v306, %v305
    %v335 = vpack.c.b16 %v308, %v307
    %v336 = vpack.c.b16 %v310, %v309
    %v337 = vpack.c.b16 %v312, %v311
    %v338 = vpack.c.b16 %v314, %v313
    %v339 = vpack.c.b16 %v316, %v315
    %v340 = vpack.c.b16 %v318, %v317
    %v341 = vpack.c.b16 %v320, %v319
    %v342 = vpack.c.b16 %v322, %v321
    %v343 = vpack.c.b16 %v324, %v323
    %v344 = vpack.c.b16 %v326, %v325
    %v345 = vpack.c.b16 %v328, %v327
    %v346 = vpack.c.b16 %v330, %v329
    %363 = vmatprep.subr.bf16.mxu0 0
    %364 = vmatpush1.bf16.msra.mxu0 %v338
    %365 = vmatprep.subr.bf16.mxu0 0
    %366 = vmatpush1.bf16.msra.mxu0 %v337
    %367 = vmatprep.subr.bf16.mxu0 0
    %368 = vmatpush1.bf16.msra.mxu0 %v336
    %369 = vmatprep.subr.bf16.mxu0 0
    %370 = vmatpush1.bf16.msra.mxu0 %v335
    %371 = vmatprep.subr.bf16.mxu0 0
    %372 = vmatpush1.bf16.msra.mxu0 %v334
    %373 = vmatprep.subr.bf16.mxu0 0
    %374 = vmatpush1.bf16.msra.mxu0 %v333
    %375 = vmatprep.subr.bf16.mxu0 0
    %376 = vmatpush1.bf16.msra.mxu0 %v332
    %377 = vmatprep.subr.bf16.mxu0 0
    %378 = vmatpush1.bf16.msra.mxu0 %v331
    %379 = vmatprep.subr.bf16.mxu0 0
    %380 = vmatpush2.bf16.msra.mxu0 %v346
    %381 = vmatprep.subr.bf16.mxu0 0
    %382 = vmatpush2.bf16.msra.mxu0 %v345
    %383 = vmatprep.subr.bf16.mxu0 0
    %384 = vmatpush2.bf16.msra.mxu0 %v344
    %385 = vmatprep.subr.bf16.mxu0 0
    %386 = vmatpush2.bf16.msra.mxu0 %v343
    %387 = vmatprep.subr.bf16.mxu0 0
    %388 = vmatpush2.bf16.msra.mxu0 %v342
    %389 = vmatprep.subr.bf16.mxu0 0
    %390 = vmatpush2.bf16.msra.mxu0 %v341
    %391 = vmatprep.subr.bf16.mxu0 0
    %392 = vmatpush2.bf16.msra.mxu0 %v340
    %393 = vmatprep.subr.bf16.mxu0 0
    %394 = vmatpush2.bf16.msra.mxu0 %v339
    %395 = vmatprep.mubr.bf16.mxu0 %v227
    %396 = vmatmul.mubr.bf16.gmra.mxu0 %v226
    %v397 = vpop.f32.mrf.mxu0
    %v398 = vadd.f32 %v265, %v397
    %v399 = vpop.f32.mrf.mxu0
    %v400 = vpop.f32.mrf.mxu0
    %v401 = vpop.f32.mrf.mxu0
    %402 = vdwg.mxu0
    %v403 = vmax.f32 %v398, 0.0
    %v404 = vpack.c.bf16 %v403, %v403
    %v405 = vld [vmem:[#allocation12] sm:$0xf]
    %v406 = vld [vmem:[#allocation12 + $0x4] sm:$0xf]
    %v407 = vld [vmem:[#allocation12 + $0x8] sm:$0xf]
    %v408 = vld [vmem:[#allocation12 + $0xc] sm:$0xf]
    %v409 = vld [vmem:[#allocation12 + $0x10] sm:$0xf]
    %v410 = vld [vmem:[#allocation12 + $0x14] sm:$0xf]
    %v411 = vld [vmem:[#allocation12 + $0x18] sm:$0xf]
    %v412 = vld [vmem:[#allocation12 + $0x1c] sm:$0xf]
    %v413 = vld [vmem:[#allocation12 + $0x20] sm:$0xf]
    %v414 = vld [vmem:[#allocation12 + $0x24] sm:$0xf]
    %v415 = vld [vmem:[#allocation12 + $0x28] sm:$0xf]
    %v416 = vld [vmem:[#allocation12 + $0x2c] sm:$0xf]
    %v417 = vld [vmem:[#allocation12 + $0x30] sm:$0xf]
    %v418 = vld [vmem:[#allocation12 + $0x34] sm:$0xf]
    %v419 = vld [vmem:[#allocation12 + $0x38] sm:$0xf]
    %v420 = vld [vmem:[#allocation12 + $0x3c] sm:$0xf]
    %v421 = vld [vmem:[%s139] sm:$0x1]
    %v423 = vlaneseq
    %v424 = vshrl.u32 %v423, 7
    %v425 = vsub.s32 0, %v424
    %v426 = vrot.slane %v421, %v425
    %v444 = vunpack.c.l.b16 %v405
    %v445 = vunpack.c.l.b16 %v406
    %v446 = vunpack.c.l.b16 %v407
    %v447 = vunpack.c.l.b16 %v408
    %v448 = vunpack.c.l.b16 %v409
    %v449 = vunpack.c.l.b16 %v410
    %v450 = vunpack.c.l.b16 %v411
    %v451 = vunpack.c.l.b16 %v412
    %v452 = vunpack.c.l.b16 %v413
    %v453 = vunpack.c.l.b16 %v414
    %v454 = vunpack.c.l.b16 %v415
    %v455 = vunpack.c.l.b16 %v416
    %v456 = vunpack.c.l.b16 %v417
    %v457 = vunpack.c.l.b16 %v418
    %v458 = vunpack.c.l.b16 %v419
    %v459 = vunpack.c.l.b16 %v420
    %v460 = vpack.c.b16 %v445, %v444
    %v461 = vpack.c.b16 %v447, %v446
    %v462 = vpack.c.b16 %v449, %v448
    %v463 = vpack.c.b16 %v451, %v450
    %v464 = vpack.c.b16 %v453, %v452
    %v465 = vpack.c.b16 %v455, %v454
    %v466 = vpack.c.b16 %v457, %v456
    %v467 = vpack.c.b16 %v459, %v458
    %476 = vmatprep.subr.bf16.mxu0 0
    %477 = vmatpush1.bf16.msra.mxu0 %v467
    %478 = vmatprep.subr.bf16.mxu0 0
    %479 = vmatpush1.bf16.msra.mxu0 %v466
    %480 = vmatprep.subr.bf16.mxu0 0
    %481 = vmatpush1.bf16.msra.mxu0 %v465
    %482 = vmatprep.subr.bf16.mxu0 0
    %483 = vmatpush1.bf16.msra.mxu0 %v464
    %484 = vmatprep.subr.bf16.mxu0 0
    %485 = vmatpush1.bf16.msra.mxu0 %v463
    %486 = vmatprep.subr.bf16.mxu0 0
    %487 = vmatpush1.bf16.msra.mxu0 %v462
    %488 = vmatprep.subr.bf16.mxu0 0
    %489 = vmatpush1.bf16.msra.mxu0 %v461
    %490 = vmatprep.subr.bf16.mxu0 0
    %491 = vmatpush1.bf16.msra.mxu0 %v460
    %492 = vmatprep.subr.bf16.mxu0 0
    %493 = vmatpush2.bf16.msra.mxu0 0
    %494 = vmatprep.subr.bf16.mxu0 0
    %495 = vmatpush2.bf16.msra.mxu0 0
    %496 = vmatprep.subr.bf16.mxu0 0
    %497 = vmatpush2.bf16.msra.mxu0 0
    %498 = vmatprep.subr.bf16.mxu0 0
    %499 = vmatpush2.bf16.msra.mxu0 0
    %500 = vmatprep.subr.bf16.mxu0 0
    %501 = vmatpush2.bf16.msra.mxu0 0
    %502 = vmatprep.subr.bf16.mxu0 0
    %503 = vmatpush2.bf16.msra.mxu0 0
    %504 = vmatprep.subr.bf16.mxu0 0
    %505 = vmatpush2.bf16.msra.mxu0 0
    %506 = vmatprep.subr.bf16.mxu0 0
    %507 = vmatpush2.bf16.msra.mxu0 0
    %508 = vmatprep.mubr.bf16.mxu0 0
    %509 = vmatmul.mubr.bf16.gmra.mxu0 %v404
    %v510 = vpop.f32.mrf.mxu0
    %v511 = vadd.f32 %v426, %v510
    %v512 = vpop.f32.mrf.mxu0
    %v513 = vpop.f32.mrf.mxu0
    %v514 = vpop.f32.mrf.mxu0
    %515 = vdwg.mxu0
    %v516 = vlaneseq
    %v517 = vand.u32 %v516, 127
    %vm518 = vcmp.lt.s32.totalorder %v517, 10
    %v519 = vsel %vm518, %v511, -1e+30
    %520 = vmax.xlane.f32.xlu0 %v519
    %v521 = vpop.xlane.xlu0 %520
    %v522 = vsub.f32 %v519, %v521
    %v523 = vmul.f32 %v522, 1.442695
    %v524 = vpow.pop %v523
    %525 = vadd.xlane.f32.xlu0 %v524
    %v526 = vpop.xlane.xlu0 %525
    %v527 = vlog2.pop %v526
    %v528 = vmul.f32 %v527, 0.6931472
    %v529 = vsub.f32 %v522, %v528
    %530 = vst [vmem:[#allocation13] sm:$0xff] %v529
    // Predicated region
    $region50: #{_mdnn_forward.1} parent=1 // pred_check
      _
    $region51: #{_mdnn_forward.1} parent=1 // pred_check_branch
      %532 = sbr.rel (0) target = $region53
    $region52: #{_mdnn_forward.1} parent=1 // pred_region
      %s534 = ssub.s32 128, 128
      %535 = vsyncadd [#allocation6], %s534
      %s537 = sshll.u32 [#allocation13], 4
      %s538 = int_to_ptr.vmem [resolvable:$true] %s537
      %540 = dma.vmem_to_hbm [thread:$0]  %s538, 128, %s8, [#allocation6]
    $region53: #{_mdnn_forward.1} parent=1 // pred_fallthru
      _
    // Predicated region
    $region54: #{_mdnn_forward.1} parent=1 // pred_check
      _
    $region55: #{_mdnn_forward.1} parent=1 // pred_check_branch
      %542 = sbr.rel (0) target = $region57
    $region56: #{_mdnn_forward.1} parent=1 // pred_region
      %543 = dma.done [#allocation6], 128
    $region57: #{_mdnn_forward.1} parent=1 // pred_fallthru
      _
    %544 = vsyncpa [#allocation5], 1
    %545 = vsyncpa [#allocation8], 1
    %546 = vsyncpa [#allocation11], 1
    %547 = vsyncpa [#allocation6], 1

</llo_original>
